<compile_context>
chip_gen: v6e
topology: v6e:2x2x1
jax: 0.10.0
libtpu: 0.0.40
codegen_flags: <defaults>
</compile_context>

<pallas_src>
import math
import numpy as np
import jax
import jax.numpy as jnp
from jax.experimental import pallas as pl
from jax.experimental.pallas import tpu as pltpu


# ---------------------------------------------------------------------------
# Kernel factory: fused encoder (+ LayerNorm / add_activation) and optional
# decoder, unrolled over a static layer list.
# Layout inside the kernel: features on sublanes, batch on lanes.
# ---------------------------------------------------------------------------
def _make_tied_ae_kernel(n_layers, use_bias, add_activation, layer_norm,
                         return_recon, compute_dtype, ln_eps=1e-5):

    def swish(t):                      # f32: mul on VPU, sigmoid on EUP
        return t * jax.nn.sigmoid(t)

    def kernel(*refs):
        it = iter(refs)
        x_ref = next(it)                                             # (D0, bc)
        w_refs = [next(it) for _ in range(n_layers)]                 # (d_out, d_in)
        b_refs = [next(it) for _ in range(n_layers)] if use_bias else []
        ln_refs = [next(it), next(it)] if layer_norm else []
        rw_refs = [next(it) for _ in range(n_layers)] if return_recon else []
        rb_refs = [next(it) for _ in range(n_layers)] if return_recon else []
        enc_ref = next(it)
        rec_ref = next(it) if return_recon else None

        # ---- encoder:  h^T <- W_i @ h^T (+ b_i), swish between layers ----
        h = x_ref[...]
        for i in range(n_layers):
            h = jnp.dot(w_refs[i][...], h, preferred_element_type=jnp.float32)
            if use_bias:
                h = h + b_refs[i][...]
            if i < n_layers - 1:
                h = swish(h).astype(compute_dtype)

        if layer_norm:                 # normalize over features (sublane axis)
            mean = jnp.mean(h, axis=0, keepdims=True)
            var = jnp.mean((h - mean) ** 2, axis=0, keepdims=True)
            h = (h - mean) * jax.lax.rsqrt(var + ln_eps)
            h = h * ln_refs[0][...] + ln_refs[1][...]
        if add_activation:
            h = swish(h)
        enc_ref[...] = h.astype(enc_ref.dtype)

        # ---- decoder (return_recon=True path) ----
        if return_recon:
            r = h if add_activation else swish(h)
            r = r.astype(compute_dtype)
            # TODO(synk): self.dropout is None in the default construction -> no-op.
            for i in range(n_layers):
                r = jnp.dot(rw_refs[i][...], r, preferred_element_type=jnp.float32)
                r = r + rb_refs[i][...]
                if i < n_layers - 1:
                    r = swish(r).astype(compute_dtype)
            rec_ref[...] = r.astype(rec_ref.dtype)

    return kernel


def _const_spec(shape):
    """Broadcast input (same block every grid step): single-buffer it."""
    idx = lambda c: (0, 0)
    try:
        return pl.BlockSpec(shape, idx, pipeline_mode=pl.Buffered(1))
    except TypeError:
        # TODO(synk): jax version without pipeline_mode -> default double buffering.
        return pl.BlockSpec(shape, idx)


# ---------------------------------------------------------------------------
# Wrapper.  Parameter layout (mirrors the torch module):
#   params["w"][i]  : (shape[i+1], shape[i])  encoder weight, torch layout
#   params["b"][i]  : (shape[i+1],)           encoder bias
#   params["rw"][j] : reversed reverse_weight_list, torch shapes
#   params["rb"][j] : reversed recon_bias_list
#   params["ln_g"/"ln_b"] : (shape[-1],)      LayerNorm params
# ---------------------------------------------------------------------------
def tied_autoencoder_forward(params, x, *, use_bias=True, add_activation=False,
                             layer_norm=False, return_recon=True,
                             block_cols=2048, compute_dtype=jnp.bfloat16):
    N, D0 = x.shape
    n_layers = len(params["w"])
    d_latent = params["w"][-1].shape[0]

    # ---- batch (lane) tile: large, multiple of 128, >=2 grid steps if possible
    bc = max(128, min(int(block_cols), ((N + 127) // 128) * 128))
    bc = (bc // 128) * 128
    if N > 128 and -(-N // bc) < 2:          # keep v7x's 2nd TensorCore busy
        bc = max(128, (bc // 2 // 128) * 128)
    Np = -(-N // bc) * bc
    grid = (Np // bc,)

    # ---- transposed layout: batch on the lane axis -> lane-dense outputs
    xt = jnp.asarray(x).T.astype(compute_dtype)            # (D0, N)
    if Np != N:
        # TODO(synk): ragged tail could use a masked pltpu.store instead of a pad.
        xt = jnp.pad(xt, ((0, 0), (0, Np - N)))

    col_map = lambda c: (0, c)
    inputs = [xt]
    in_specs = [pl.BlockSpec((D0, bc), col_map)]

    def add_const(arr):
        inputs.append(arr)
        in_specs.append(_const_spec(arr.shape))

    # encoder weights in their native torch (out, in) layout (no host .T needed)
    for w in params["w"]:
        add_const(jnp.asarray(w).astype(compute_dtype))
    if use_bias:
        for b in params["b"]:
            add_const(jnp.asarray(b, jnp.float32).reshape(-1, 1))
    if layer_norm:
        add_const(jnp.asarray(params["ln_g"], jnp.float32).reshape(-1, 1))
        add_const(jnp.asarray(params["ln_b"], jnp.float32).reshape(-1, 1))
    if return_recon:
        # decoder step j in the module is  x @ rw[j]  (== F.linear(x, rw.t()));
        # the transposed layout needs rw[j].T @ x^T, i.e. (out, in) orientation.
        for rw in params["rw"]:
            add_const(jnp.asarray(rw).T.astype(compute_dtype))
        for rb in params["rb"]:
            add_const(jnp.asarray(rb, jnp.float32).reshape(-1, 1))

    enc_shape = jax.ShapeDtypeStruct((d_latent, Np), jnp.float32)
    enc_spec = pl.BlockSpec((d_latent, bc), col_map)
    if return_recon:
        out_shape = (enc_shape, jax.ShapeDtypeStruct((D0, Np), jnp.float32))
        out_specs = (enc_spec, pl.BlockSpec((D0, bc), col_map))
    else:
        out_shape = enc_shape
        out_specs = enc_spec

    # ---- VMEM budget: double-buffered I/O tiles + single-buffered params
    io_bytes = 2 * (D0 * bc * jnp.dtype(compute_dtype).itemsize
                    + d_latent * bc * 4
                    + (D0 * bc * 4 if return_recon else 0))
    param_bytes = sum(int(np.prod(a.shape)) * a.dtype.itemsize for a in inputs[1:])
    vmem_limit = int(min(max(32 << 20, io_bytes + param_bytes + (4 << 20)), 56 << 20))
    # TODO(synk): for large shape_lists add a K/feature-dim tiling path
    # ("arbitrary" reduction axis + f32 VMEM accumulator) so that weights need
    # not be fully resident (matters first on v7x's 64 MiB VMEM).

    kernel = _make_tied_ae_kernel(n_layers, use_bias, add_activation,
                                  layer_norm, return_recon, compute_dtype)

    out = pl.pallas_call(
        kernel,
        out_shape=out_shape,
        grid=grid,
        in_specs=in_specs,
        out_specs=out_specs,
        compiler_params=pltpu.CompilerParams(
            dimension_semantics=("parallel",),
            vmem_limit_bytes=vmem_limit),
    )(*inputs)

    if return_recon:
        enc_t, rec_t = out
        return enc_t[:, :N].T, rec_t[:, :N].T
    return out[:, :N].T


# ---------------------------------------------------------------------------
# Deterministic parameter init (mirrors the module's parameter shapes;
# kaiming-uniform-ish values — exact init distribution is irrelevant to the
# forward-pass semantics being tested).  LayerNorm params = ones / zeros.
# ---------------------------------------------------------------------------
def init_params(key, shape_list):
    n_layers = len(shape_list) - 1
    keys = jax.random.split(key, 4 * n_layers)
    w, b, rw_fwd, rb_fwd = [], [], [], []
    for i in range(n_layers):
        fan_in, fan_out = shape_list[i], shape_list[i + 1]
        bound_w = math.sqrt(6.0 / fan_in)
        w.append(jax.random.uniform(keys[4 * i], (fan_out, fan_in),
                                    jnp.float32, -bound_w, bound_w))
        bound_b = 1.0 / math.sqrt(fan_in)
        b.append(jax.random.uniform(keys[4 * i + 1], (fan_out,),
                                    jnp.float32, -bound_b, bound_b))
        bound_rw = math.sqrt(6.0 / fan_out)
        rw_fwd.append(jax.random.uniform(keys[4 * i + 2], (fan_out, fan_in),
                                         jnp.float32, -bound_rw, bound_rw))
        bound_rb = 1.0 / math.sqrt(fan_out)
        rb_fwd.append(jax.random.uniform(keys[4 * i + 3], (fan_in,),
                                         jnp.float32, -bound_rb, bound_rb))
    return {
        "w": w, "b": b,
        "rw": rw_fwd[::-1],        # reversed reverse_weight_list (torch shapes)
        "rb": rb_fwd[::-1],        # reversed recon_bias_list
        "ln_g": jnp.ones((shape_list[-1],), jnp.float32),
        "ln_b": jnp.zeros((shape_list[-1],), jnp.float32),
    }


# ---------------------------------------------------------------------------
# Pure-JAX reference (mirrors TiedAutoEncoder.encoder/decoder), parameterized
# by the matmul operand dtype so both the f32 and bf16 paths can be verified.
# ---------------------------------------------------------------------------
def reference_forward(params, x, *, use_bias=True, add_activation=False,
                      layer_norm=False, return_recon=True, eps=1e-5,
                      compute_dtype=jnp.float32):
    def swish(t):
        return t * jax.nn.sigmoid(t)

    def mm(a, w):
        return jnp.dot(a.astype(compute_dtype), w.astype(compute_dtype),
                       preferred_element_type=jnp.float32,
                       precision=jax.lax.Precision.HIGHEST)

    n_layers = len(params["w"])
    h = jnp.asarray(x, jnp.float32)
    for i in range(n_layers):
        h = mm(h, jnp.asarray(params["w"][i]).T)
        if use_bias:
            h = h + params["b"][i]
        if i < n_layers - 1:
            h = swish(h)
    if layer_norm:
        m = jnp.mean(h, -1, keepdims=True)
        v = jnp.mean((h - m) ** 2, -1, keepdims=True)
        h = (h - m) / jnp.sqrt(v + eps) * params["ln_g"] + params["ln_b"]
    if add_activation:
        h = swish(h)
    if not return_recon:
        return h
    r = h if add_activation else swish(h)
    for i in range(n_layers):
        r = mm(r, jnp.asarray(params["rw"][i])) + params["rb"][i]
        if i < n_layers - 1:
            r = swish(r)
    return h, r


# TODO(synk): fit()/predict() (Adam loop, PCA warm-start, early stopping) and
# sparse_autoencoder_error are host-side training utilities, not a kernel.

if __name__ == "__main__":
    # small shapes consistent with the module: shape_list=[32, 64, 16], 256 rows
    shape_list = [32, 64, 16]
    n_rows = 256

    key = jax.random.PRNGKey(0)
    kx, kp = jax.random.split(key)
    x = jax.random.normal(kx, (n_rows, shape_list[0]), jnp.float32)
    params = init_params(kp, shape_list)

    # 1) default performance path: bf16 matmul operands, fused encoder+decoder
    enc, rec = tied_autoencoder_forward(params, x, return_recon=True)
    jax.block_until_ready((enc, rec))
    ref_enc, ref_rec = reference_forward(params, x, return_recon=True,
                                         compute_dtype=jnp.bfloat16)
    np.testing.assert_allclose(np.asarray(enc), np.asarray(ref_enc),
                               rtol=1e-2, atol=1e-2)
    np.testing.assert_allclose(np.asarray(rec), np.asarray(ref_rec),
                               rtol=1e-2, atol=1e-2)

    # 2) exact f32 path matches the torch-module math tightly
    enc32, rec32 = tied_autoencoder_forward(params, x, return_recon=True,
                                            compute_dtype=jnp.float32)
    jax.block_until_ready((enc32, rec32))
    ref_enc32, ref_rec32 = reference_forward(params, x, return_recon=True)
    np.testing.assert_allclose(np.asarray(enc32), np.asarray(ref_enc32),
                               rtol=2e-3, atol=2e-3)
    np.testing.assert_allclose(np.asarray(rec32), np.asarray(ref_rec32),
                               rtol=2e-3, atol=2e-3)

    # 3) encoder-only forward (module default), exercising LayerNorm + add_activation
    enc_only = tied_autoencoder_forward(params, x, return_recon=False,
                                        layer_norm=True, add_activation=True,
                                        compute_dtype=jnp.float32)
    jax.block_until_ready(enc_only)
    ref_only = reference_forward(params, x, return_recon=False,
                                 layer_norm=True, add_activation=True)
    np.testing.assert_allclose(np.asarray(enc_only), np.asarray(ref_only),
                               rtol=2e-3, atol=2e-3)

    print("KERNEL_OK")
</pallas_src>

<mosaic_0001>
module attributes {stable_mosaic.version = 11 : i64} {
  func.func @kernel(%arg0: i32, %arg1: memref<32x128xbf16, #tpu.memory_space<vmem>>, %arg2: memref<64x32xbf16, #tpu.memory_space<vmem>>, %arg3: memref<16x64xbf16, #tpu.memory_space<vmem>>, %arg4: memref<64x1xf32, #tpu.memory_space<vmem>>, %arg5: memref<16x1xf32, #tpu.memory_space<vmem>>, %arg6: memref<64x16xbf16, #tpu.memory_space<vmem>>, %arg7: memref<32x64xbf16, #tpu.memory_space<vmem>>, %arg8: memref<64x1xf32, #tpu.memory_space<vmem>>, %arg9: memref<32x1xf32, #tpu.memory_space<vmem>>, %arg10: memref<16x128xf32, #tpu.memory_space<vmem>>, %arg11: memref<32x128xf32, #tpu.memory_space<vmem>>) attributes {dimension_semantics = [#tpu.dimension_semantics<parallel>], iteration_bounds = array<i64: 2>, scalar_prefetch = 0 : i64, scratch_operands = 0 : i64, tpu.core_type = #tpu.core_type<tc>, window_params = [{transform_indices = @transform_0, window_bounds = array<i64: 32, 128>}, {pipeline_mode = #tpu.pipeline_mode<synchronous>, transform_indices = @transform_1, window_bounds = array<i64: 64, 32>}, {pipeline_mode = #tpu.pipeline_mode<synchronous>, transform_indices = @transform_2, window_bounds = array<i64: 16, 64>}, {pipeline_mode = #tpu.pipeline_mode<synchronous>, transform_indices = @transform_3, window_bounds = array<i64: 64, 1>}, {pipeline_mode = #tpu.pipeline_mode<synchronous>, transform_indices = @transform_4, window_bounds = array<i64: 16, 1>}, {pipeline_mode = #tpu.pipeline_mode<synchronous>, transform_indices = @transform_5, window_bounds = array<i64: 64, 16>}, {pipeline_mode = #tpu.pipeline_mode<synchronous>, transform_indices = @transform_6, window_bounds = array<i64: 32, 64>}, {pipeline_mode = #tpu.pipeline_mode<synchronous>, transform_indices = @transform_7, window_bounds = array<i64: 64, 1>}, {pipeline_mode = #tpu.pipeline_mode<synchronous>, transform_indices = @transform_8, window_bounds = array<i64: 32, 1>}, {transform_indices = @transform_9, window_bounds = array<i64: 16, 128>}, {transform_indices = @transform_10, window_bounds = array<i64: 32, 128>}]} {
    %c0 = arith.constant 0 : index
    %c0_0 = arith.constant 0 : index
    %0 = vector.load %arg1[%c0, %c0_0] : memref<32x128xbf16, #tpu.memory_space<vmem>>, vector<32x128xbf16>
    %c0_1 = arith.constant 0 : index
    %c0_2 = arith.constant 0 : index
    %1 = vector.load %arg2[%c0_1, %c0_2] : memref<64x32xbf16, #tpu.memory_space<vmem>>, vector<64x32xbf16>
    %cst = arith.constant dense<0.000000e+00> : vector<64x128xf32>
    %2 = tpu.matmul %1, %0, %cst {dimension_numbers = #tpu.dot_dimension_numbers<[1], [0], [0], [1], [0, 0, 1, 1], [], []>} : vector<64x32xbf16>, vector<32x128xbf16>, vector<64x128xf32> -> vector<64x128xf32>
    %c0_3 = arith.constant 0 : index
    %c0_4 = arith.constant 0 : index
    %3 = vector.load %arg4[%c0_3, %c0_4] : memref<64x1xf32, #tpu.memory_space<vmem>>, vector<64x1xf32>
    %4 = vector.broadcast %3 : vector<64x1xf32> to vector<64x128xf32>
    %5 = arith.addf %2, %4 : vector<64x128xf32>
    %6 = arith.negf %5 : vector<64x128xf32>
    %7 = math.exp %6 : vector<64x128xf32>
    %cst_5 = arith.constant 1.000000e+00 : f32
    %8 = vector.broadcast %cst_5 : f32 to vector<64x128xf32>
    %9 = arith.addf %8, %7 : vector<64x128xf32>
    %10 = arith.divf %8, %9 : vector<64x128xf32>
    %11 = arith.mulf %5, %10 : vector<64x128xf32>
    %12 = arith.truncf %11 : vector<64x128xf32> to vector<64x128xbf16>
    %c0_6 = arith.constant 0 : index
    %c0_7 = arith.constant 0 : index
    %13 = vector.load %arg3[%c0_6, %c0_7] : memref<16x64xbf16, #tpu.memory_space<vmem>>, vector<16x64xbf16>
    %cst_8 = arith.constant dense<0.000000e+00> : vector<16x128xf32>
    %14 = tpu.matmul %13, %12, %cst_8 {dimension_numbers = #tpu.dot_dimension_numbers<[1], [0], [0], [1], [0, 0, 1, 1], [], []>} : vector<16x64xbf16>, vector<64x128xbf16>, vector<16x128xf32> -> vector<16x128xf32>
    %c0_9 = arith.constant 0 : index
    %c0_10 = arith.constant 0 : index
    %15 = vector.load %arg5[%c0_9, %c0_10] : memref<16x1xf32, #tpu.memory_space<vmem>>, vector<16x1xf32>
    %16 = vector.broadcast %15 : vector<16x1xf32> to vector<16x128xf32>
    %17 = arith.addf %14, %16 : vector<16x128xf32>
    %c0_11 = arith.constant 0 : index
    %c0_12 = arith.constant 0 : index
    %18 = vector.load %arg10[%c0_11, %c0_12] : memref<16x128xf32, #tpu.memory_space<vmem>>, vector<16x128xf32>
    tpu.vector_store %arg10[%c0_11, %c0_12], %17 {strides = array<i32>} : memref<16x128xf32, #tpu.memory_space<vmem>>, vector<16x128xf32>,
    %19 = arith.negf %17 : vector<16x128xf32>
    %20 = math.exp %19 : vector<16x128xf32>
    %cst_13 = arith.constant 1.000000e+00 : f32
    %21 = vector.broadcast %cst_13 : f32 to vector<16x128xf32>
    %22 = arith.addf %21, %20 : vector<16x128xf32>
    %23 = arith.divf %21, %22 : vector<16x128xf32>
    %24 = arith.mulf %17, %23 : vector<16x128xf32>
    %25 = arith.truncf %24 : vector<16x128xf32> to vector<16x128xbf16>
    %c0_14 = arith.constant 0 : index
    %c0_15 = arith.constant 0 : index
    %26 = vector.load %arg6[%c0_14, %c0_15] : memref<64x16xbf16, #tpu.memory_space<vmem>>, vector<64x16xbf16>
    %cst_16 = arith.constant dense<0.000000e+00> : vector<64x128xf32>
    %27 = tpu.matmul %26, %25, %cst_16 {dimension_numbers = #tpu.dot_dimension_numbers<[1], [0], [0], [1], [0, 0, 1, 1], [], []>} : vector<64x16xbf16>, vector<16x128xbf16>, vector<64x128xf32> -> vector<64x128xf32>
    %c0_17 = arith.constant 0 : index
    %c0_18 = arith.constant 0 : index
    %28 = vector.load %arg8[%c0_17, %c0_18] : memref<64x1xf32, #tpu.memory_space<vmem>>, vector<64x1xf32>
    %29 = vector.broadcast %28 : vector<64x1xf32> to vector<64x128xf32>
    %30 = arith.addf %27, %29 : vector<64x128xf32>
    %31 = arith.negf %30 : vector<64x128xf32>
    %32 = math.exp %31 : vector<64x128xf32>
    %cst_19 = arith.constant 1.000000e+00 : f32
    %33 = vector.broadcast %cst_19 : f32 to vector<64x128xf32>
    %34 = arith.addf %33, %32 : vector<64x128xf32>
    %35 = arith.divf %33, %34 : vector<64x128xf32>
    %36 = arith.mulf %30, %35 : vector<64x128xf32>
    %37 = arith.truncf %36 : vector<64x128xf32> to vector<64x128xbf16>
    %c0_20 = arith.constant 0 : index
    %c0_21 = arith.constant 0 : index
    %38 = vector.load %arg7[%c0_20, %c0_21] : memref<32x64xbf16, #tpu.memory_space<vmem>>, vector<32x64xbf16>
    %cst_22 = arith.constant dense<0.000000e+00> : vector<32x128xf32>
    %39 = tpu.matmul %38, %37, %cst_22 {dimension_numbers = #tpu.dot_dimension_numbers<[1], [0], [0], [1], [0, 0, 1, 1], [], []>} : vector<32x64xbf16>, vector<64x128xbf16>, vector<32x128xf32> -> vector<32x128xf32>
    %c0_23 = arith.constant 0 : index
    %c0_24 = arith.constant 0 : index
    %40 = vector.load %arg9[%c0_23, %c0_24] : memref<32x1xf32, #tpu.memory_space<vmem>>, vector<32x1xf32>
    %41 = vector.broadcast %40 : vector<32x1xf32> to vector<32x128xf32>
    %42 = arith.addf %39, %41 : vector<32x128xf32>
    %c0_25 = arith.constant 0 : index
    %c0_26 = arith.constant 0 : index
    %43 = vector.load %arg11[%c0_25, %c0_26] : memref<32x128xf32, #tpu.memory_space<vmem>>, vector<32x128xf32>
    tpu.vector_store %arg11[%c0_25, %c0_26], %42 {strides = array<i32>} : memref<32x128xf32, #tpu.memory_space<vmem>>, vector<32x128xf32>,
    return
  }
  func.func @transform_0(%arg0: i32) -> (i32, i32) {
    %c0_i32 = arith.constant 0 : i32
    %c0_i32_0 = arith.constant 0 : i32
    return %c0_i32, %arg0 : i32, i32
  }
  func.func @transform_1(%arg0: i32) -> (i32, i32) {
    %c0_i32 = arith.constant 0 : i32
    %c0_i32_0 = arith.constant 0 : i32
    %c0_i32_1 = arith.constant 0 : i32
    return %c0_i32, %c0_i32_0 : i32, i32
  }
  func.func @transform_2(%arg0: i32) -> (i32, i32) {
    %c0_i32 = arith.constant 0 : i32
    %c0_i32_0 = arith.constant 0 : i32
    %c0_i32_1 = arith.constant 0 : i32
    return %c0_i32, %c0_i32_0 : i32, i32
  }
  func.func @transform_3(%arg0: i32) -> (i32, i32) {
    %c0_i32 = arith.constant 0 : i32
    %c0_i32_0 = arith.constant 0 : i32
    %c0_i32_1 = arith.constant 0 : i32
    return %c0_i32, %c0_i32_0 : i32, i32
  }
  func.func @transform_4(%arg0: i32) -> (i32, i32) {
    %c0_i32 = arith.constant 0 : i32
    %c0_i32_0 = arith.constant 0 : i32
    %c0_i32_1 = arith.constant 0 : i32
    return %c0_i32, %c0_i32_0 : i32, i32
  }
  func.func @transform_5(%arg0: i32) -> (i32, i32) {
    %c0_i32 = arith.constant 0 : i32
    %c0_i32_0 = arith.constant 0 : i32
    %c0_i32_1 = arith.constant 0 : i32
    return %c0_i32, %c0_i32_0 : i32, i32
  }
  func.func @transform_6(%arg0: i32) -> (i32, i32) {
    %c0_i32 = arith.constant 0 : i32
    %c0_i32_0 = arith.constant 0 : i32
    %c0_i32_1 = arith.constant 0 : i32
    return %c0_i32, %c0_i32_0 : i32, i32
  }
  func.func @transform_7(%arg0: i32) -> (i32, i32) {
    %c0_i32 = arith.constant 0 : i32
    %c0_i32_0 = arith.constant 0 : i32
    %c0_i32_1 = arith.constant 0 : i32
    return %c0_i32, %c0_i32_0 : i32, i32
  }
  func.func @transform_8(%arg0: i32) -> (i32, i32) {
    %c0_i32 = arith.constant 0 : i32
    %c0_i32_0 = arith.constant 0 : i32
    %c0_i32_1 = arith.constant 0 : i32
    return %c0_i32, %c0_i32_0 : i32, i32
  }
  func.func @transform_9(%arg0: i32) -> (i32, i32) {
    %c0_i32 = arith.constant 0 : i32
    %c0_i32_0 = arith.constant 0 : i32
    return %c0_i32, %arg0 : i32, i32
  }
  func.func @transform_10(%arg0: i32) -> (i32, i32) {
    %c0_i32 = arith.constant 0 : i32
    %c0_i32_0 = arith.constant 0 : i32
    return %c0_i32, %arg0 : i32, i32
  }
}

</mosaic_0001>

<llo_original>
// kernel: tpu_custom_call.1
$region0: #{tpu_custom_call.1}
  #allocation0 [shape = 'u32[]', space=smem, size = 0x4, offset = 0x4, fixed_abs, tag = 'smem constant byte address 0x4 - core index']
  #allocation1 [shape = 'u32[144,128]{1,0:T(1,128)}', space=vmem, size = 0x12000, scoped, tag = 'internal scratch']
  %s0 = inlined_call_operand.vmem [shape: bf16[32,256], index: 0, kind: input, shape index: {}]
  %s1 = inlined_call_operand.vmem [shape: bf16[64,32], index: 1, kind: input, shape index: {}]
  %s2 = inlined_call_operand.vmem [shape: bf16[16,64], index: 2, kind: input, shape index: {}]
  %s3 = inlined_call_operand.vmem [shape: f32[64,1], index: 3, kind: input, shape index: {}]
  %s4 = inlined_call_operand.vmem [shape: f32[16,1], index: 4, kind: input, shape index: {}]
  %s5 = inlined_call_operand.vmem [shape: bf16[64,16], index: 5, kind: input, shape index: {}]
  %s6 = inlined_call_operand.vmem [shape: bf16[32,64], index: 6, kind: input, shape index: {}]
  %s7 = inlined_call_operand.vmem [shape: f32[64,1], index: 7, kind: input, shape index: {}]
  %s8 = inlined_call_operand.vmem [shape: f32[32,1], index: 8, kind: input, shape index: {}]
  %s9 = inlined_call_operand.hbm [shape: f32[16,256], index: 9, kind: output, shape index: {0}]
  %s10 = inlined_call_operand.hbm [shape: f32[32,256], index: 10, kind: output, shape index: {1}]
  %11 = xla_tuple %s9, %s10
  %s12 = sld [smem:[#allocation0]]
  $region118: #{tpu_custom_call.1} parent=0
    _
  %s14 = ssub.s32 1, %s12
  %s15 = scalar_select 0, %s14, %s12
  $region1: #{tpu_custom_call.1} parent=0
    #allocation2 [shape = 'u8[16384]{0}', space=vmem, size = 0x4000, scoped, tag = 'input window, operand 0']
    #allocation3 [shape = 'u8[16384]{0}', space=vmem, size = 0x4000, scoped, tag = 'output window, operand 0']
    #allocation4 [shape = 's32[2]{0}', space=sflag, size = 0x8, scoped, tag = 'scoped memory for tpu_custom_call.1']
    #allocation5 [shape = 'u8[32768]{0}', space=vmem, size = 0x8000, scoped, tag = 'output window, operand 1']
    #allocation6 [shape = 's32[2]{0}', space=sflag, size = 0x8, scoped, tag = 'scoped memory for tpu_custom_call.1']
    %16 = vsyncpa [#allocation4], 0
    %s17 = scalar_lea.sflag [#allocation4], 1
    %18 = vsyncpa %s17, 0
    %19 = vsyncpa [#allocation6], 0
    %s20 = scalar_lea.sflag [#allocation6], 1
    %21 = vsyncpa %s20, 0
    loop: start=0, step=1, limit=4
    $region2: #{tpu_custom_call.1} parent=1 // loop_pre_header
      _
    $region3: #{tpu_custom_call.1} parent=1 // loop_header
      %s23 = sphi 0, %s27
      %p24 = scmp.ge.s32.totalorder %s23, 4
      %s33 = sphi 0, %s35
      %s36 = sphi 0, %s33
      %s37 = sphi 0, %s36
      %s53 = sphi 0, %s37
      %s57 = sphi 0, %s57
      %s59 = sphi 0, %s57
      %s60 = sphi 0, %s59
      %s74 = sphi 0, %s60
      %s78 = sphi 0, %s78
      %s80 = sphi 0, %s78
      %s81 = sphi 0, %s80
      %s95 = sphi 0, %s81
      %s99 = sphi 0, %s99
      %s101 = sphi 0, %s99
      %s102 = sphi 0, %s101
      %s116 = sphi 0, %s102
      %s120 = sphi 0, %s120
      %s122 = sphi 0, %s120
      %s123 = sphi 0, %s122
      %s137 = sphi 0, %s123
      %s141 = sphi 0, %s141
      %s143 = sphi 0, %s141
      %s144 = sphi 0, %s143
      %s158 = sphi 0, %s144
      %s162 = sphi 0, %s162
      %s164 = sphi 0, %s162
      %s165 = sphi 0, %s164
      %s179 = sphi 0, %s165
      %s183 = sphi 0, %s183
      %s185 = sphi 0, %s183
      %s186 = sphi 0, %s185
      %s200 = sphi 0, %s186
      %s204 = sphi 0, %s204
      %s206 = sphi 0, %s204
      %s207 = sphi 0, %s206
      %s221 = sphi 0, %s207
      %s227 = sphi 0, %s229
      %s230 = sphi 0, %s227
      %s231 = sphi 0, %s230
      %s247 = sphi 0, %s231
      %s253 = sphi 0, %s255
      %s256 = sphi 0, %s253
      %s257 = sphi 0, %s256
      %s273 = sphi 0, %s257
    $region4: #{tpu_custom_call.1} parent=1 // loop_header_branch
      %26 = sbr.rel (%p24) target = $region8
    $region5: #{tpu_custom_call.1} parent=1 // loop_body
      %s28 = ssub.s32 %s23, 1
      %s29 = ssub.s32 %s23, 2
      %s30 = sadd.s32 %s23, 1
      %s31 = ssub.s32 %s23, %s30
      %p32 = scmp.eq.s32.totalorder %s31, 0
      %s34 = sadd.s32 %s33, 1
      %s35 = scalar_select %p32, %s33, %s34
      %p38 = pneg %p32
      %p39 = scmp.eq.s32.totalorder %s23, 1
      %p40 = por %p38, %p39
      %p41 = scmp.ne.s32.totalorder %s33, %s36
      %p42 = scmp.eq.s32.totalorder %s23, 0
      %p43 = por %p41, %p42
      %p44 = scmp.ne.s32.totalorder %s33, %s36
      %p45 = scmp.eq.s32.totalorder %s28, 1
      %p46 = por %p44, %p45
      %p47 = scmp.ne.s32.totalorder %s36, %s37
      %p48 = scmp.eq.s32.totalorder %s28, 0
      %p49 = por %p47, %p48
      %p50 = scmp.ne.s32.totalorder %s36, %s37
      %p51 = scmp.eq.s32.totalorder %s29, 1
      %p52 = por %p50, %p51
      %p54 = scmp.ne.s32.totalorder %s37, %s53
      %p55 = scmp.eq.s32.totalorder %s29, 0
      %p56 = por %p54, %p55
      %s58 = sadd.s32 %s57, 1
      %p61 = scmp.eq.s32.totalorder %s23, 1
      %p62 = scmp.ne.s32.totalorder %s57, %s59
      %p63 = scmp.eq.s32.totalorder %s23, 0
      %p64 = por %p62, %p63
      %p65 = scmp.ne.s32.totalorder %s57, %s59
      %p66 = scmp.eq.s32.totalorder %s28, 1
      %p67 = por %p65, %p66
      %p68 = scmp.ne.s32.totalorder %s59, %s60
      %p69 = scmp.eq.s32.totalorder %s28, 0
      %p70 = por %p68, %p69
      %p71 = scmp.ne.s32.totalorder %s59, %s60
      %p72 = scmp.eq.s32.totalorder %s29, 1
      %p73 = por %p71, %p72
      %p75 = scmp.ne.s32.totalorder %s60, %s74
      %p76 = scmp.eq.s32.totalorder %s29, 0
      %p77 = por %p75, %p76
      %s79 = sadd.s32 %s78, 1
      %p82 = scmp.eq.s32.totalorder %s23, 1
      %p83 = scmp.ne.s32.totalorder %s78, %s80
      %p84 = scmp.eq.s32.totalorder %s23, 0
      %p85 = por %p83, %p84
      %p86 = scmp.ne.s32.totalorder %s78, %s80
      %p87 = scmp.eq.s32.totalorder %s28, 1
      %p88 = por %p86, %p87
      %p89 = scmp.ne.s32.totalorder %s80, %s81
      %p90 = scmp.eq.s32.totalorder %s28, 0
      %p91 = por %p89, %p90
      %p92 = scmp.ne.s32.totalorder %s80, %s81
      %p93 = scmp.eq.s32.totalorder %s29, 1
      %p94 = por %p92, %p93
      %p96 = scmp.ne.s32.totalorder %s81, %s95
      %p97 = scmp.eq.s32.totalorder %s29, 0
      %p98 = por %p96, %p97
      %s100 = sadd.s32 %s99, 1
      %p103 = scmp.eq.s32.totalorder %s23, 1
      %p104 = scmp.ne.s32.totalorder %s99, %s101
      %p105 = scmp.eq.s32.totalorder %s23, 0
      %p106 = por %p104, %p105
      %p107 = scmp.ne.s32.totalorder %s99, %s101
      %p108 = scmp.eq.s32.totalorder %s28, 1
      %p109 = por %p107, %p108
      %p110 = scmp.ne.s32.totalorder %s101, %s102
      %p111 = scmp.eq.s32.totalorder %s28, 0
      %p112 = por %p110, %p111
      %p113 = scmp.ne.s32.totalorder %s101, %s102
      %p114 = scmp.eq.s32.totalorder %s29, 1
      %p115 = por %p113, %p114
      %p117 = scmp.ne.s32.totalorder %s102, %s116
      %p118 = scmp.eq.s32.totalorder %s29, 0
      %p119 = por %p117, %p118
      %s121 = sadd.s32 %s120, 1
      %p124 = scmp.eq.s32.totalorder %s23, 1
      %p125 = scmp.ne.s32.totalorder %s120, %s122
      %p126 = scmp.eq.s32.totalorder %s23, 0
      %p127 = por %p125, %p126
      %p128 = scmp.ne.s32.totalorder %s120, %s122
      %p129 = scmp.eq.s32.totalorder %s28, 1
      %p130 = por %p128, %p129
      %p131 = scmp.ne.s32.totalorder %s122, %s123
      %p132 = scmp.eq.s32.totalorder %s28, 0
      %p133 = por %p131, %p132
      %p134 = scmp.ne.s32.totalorder %s122, %s123
      %p135 = scmp.eq.s32.totalorder %s29, 1
      %p136 = por %p134, %p135
      %p138 = scmp.ne.s32.totalorder %s123, %s137
      %p139 = scmp.eq.s32.totalorder %s29, 0
      %p140 = por %p138, %p139
      %s142 = sadd.s32 %s141, 1
      %p145 = scmp.eq.s32.totalorder %s23, 1
      %p146 = scmp.ne.s32.totalorder %s141, %s143
      %p147 = scmp.eq.s32.totalorder %s23, 0
      %p148 = por %p146, %p147
      %p149 = scmp.ne.s32.totalorder %s141, %s143
      %p150 = scmp.eq.s32.totalorder %s28, 1
      %p151 = por %p149, %p150
      %p152 = scmp.ne.s32.totalorder %s143, %s144
      %p153 = scmp.eq.s32.totalorder %s28, 0
      %p154 = por %p152, %p153
      %p155 = scmp.ne.s32.totalorder %s143, %s144
      %p156 = scmp.eq.s32.totalorder %s29, 1
      %p157 = por %p155, %p156
      %p159 = scmp.ne.s32.totalorder %s144, %s158
      %p160 = scmp.eq.s32.totalorder %s29, 0
      %p161 = por %p159, %p160
      %s163 = sadd.s32 %s162, 1
      %p166 = scmp.eq.s32.totalorder %s23, 1
      %p167 = scmp.ne.s32.totalorder %s162, %s164
      %p168 = scmp.eq.s32.totalorder %s23, 0
      %p169 = por %p167, %p168
      %p170 = scmp.ne.s32.totalorder %s162, %s164
      %p171 = scmp.eq.s32.totalorder %s28, 1
      %p172 = por %p170, %p171
      %p173 = scmp.ne.s32.totalorder %s164, %s165
      %p174 = scmp.eq.s32.totalorder %s28, 0
      %p175 = por %p173, %p174
      %p176 = scmp.ne.s32.totalorder %s164, %s165
      %p177 = scmp.eq.s32.totalorder %s29, 1
      %p178 = por %p176, %p177
      %p180 = scmp.ne.s32.totalorder %s165, %s179
      %p181 = scmp.eq.s32.totalorder %s29, 0
      %p182 = por %p180, %p181
      %s184 = sadd.s32 %s183, 1
      %p187 = scmp.eq.s32.totalorder %s23, 1
      %p188 = scmp.ne.s32.totalorder %s183, %s185
      %p189 = scmp.eq.s32.totalorder %s23, 0
      %p190 = por %p188, %p189
      %p191 = scmp.ne.s32.totalorder %s183, %s185
      %p192 = scmp.eq.s32.totalorder %s28, 1
      %p193 = por %p191, %p192
      %p194 = scmp.ne.s32.totalorder %s185, %s186
      %p195 = scmp.eq.s32.totalorder %s28, 0
      %p196 = por %p194, %p195
      %p197 = scmp.ne.s32.totalorder %s185, %s186
      %p198 = scmp.eq.s32.totalorder %s29, 1
      %p199 = por %p197, %p198
      %p201 = scmp.ne.s32.totalorder %s186, %s200
      %p202 = scmp.eq.s32.totalorder %s29, 0
      %p203 = por %p201, %p202
      %s205 = sadd.s32 %s204, 1
      %p208 = scmp.eq.s32.totalorder %s23, 1
      %p209 = scmp.ne.s32.totalorder %s204, %s206
      %p210 = scmp.eq.s32.totalorder %s23, 0
      %p211 = por %p209, %p210
      %p212 = scmp.ne.s32.totalorder %s204, %s206
      %p213 = scmp.eq.s32.totalorder %s28, 1
      %p214 = por %p212, %p213
      %p215 = scmp.ne.s32.totalorder %s206, %s207
      %p216 = scmp.eq.s32.totalorder %s28, 0
      %p217 = por %p215, %p216
      %p218 = scmp.ne.s32.totalorder %s206, %s207
      %p219 = scmp.eq.s32.totalorder %s29, 1
      %p220 = por %p218, %p219
      %p222 = scmp.ne.s32.totalorder %s207, %s221
      %p223 = scmp.eq.s32.totalorder %s29, 0
      %p224 = por %p222, %p223
      %s225 = ssub.s32 %s23, %s30
      %p226 = scmp.eq.s32.totalorder %s225, 0
      %s228 = sadd.s32 %s227, 1
      %s229 = scalar_select %p226, %s227, %s228
      %p232 = pneg %p226
      %p233 = scmp.eq.s32.totalorder %s23, 1
      %p234 = por %p232, %p233
      %p235 = scmp.ne.s32.totalorder %s227, %s230
      %p236 = scmp.eq.s32.totalorder %s23, 0
      %p237 = por %p235, %p236
      %p238 = scmp.ne.s32.totalorder %s227, %s230
      %p239 = scmp.eq.s32.totalorder %s28, 1
      %p240 = por %p238, %p239
      %p241 = scmp.ne.s32.totalorder %s230, %s231
      %p242 = scmp.eq.s32.totalorder %s28, 0
      %p243 = por %p241, %p242
      %p244 = scmp.ne.s32.totalorder %s230, %s231
      %p245 = scmp.eq.s32.totalorder %s29, 1
      %p246 = por %p244, %p245
      %p248 = scmp.ne.s32.totalorder %s231, %s247
      %p249 = scmp.eq.s32.totalorder %s29, 0
      %p250 = por %p248, %p249
      %s251 = ssub.s32 %s23, %s30
      %p252 = scmp.eq.s32.totalorder %s251, 0
      %s254 = sadd.s32 %s253, 1
      %s255 = scalar_select %p252, %s253, %s254
      %p258 = pneg %p252
      %p259 = scmp.eq.s32.totalorder %s23, 1
      %p260 = por %p258, %p259
      %p261 = scmp.ne.s32.totalorder %s253, %s256
      %p262 = scmp.eq.s32.totalorder %s23, 0
      %p263 = por %p261, %p262
      %p264 = scmp.ne.s32.totalorder %s253, %s256
      %p265 = scmp.eq.s32.totalorder %s28, 1
      %p266 = por %p264, %p265
      %p267 = scmp.ne.s32.totalorder %s256, %s257
      %p268 = scmp.eq.s32.totalorder %s28, 0
      %p269 = por %p267, %p268
      %p270 = scmp.ne.s32.totalorder %s256, %s257
      %p271 = scmp.eq.s32.totalorder %s29, 1
      %p272 = por %p270, %p271
      %p274 = scmp.ne.s32.totalorder %s257, %s273
      %p275 = scmp.eq.s32.totalorder %s29, 0
      %p276 = por %p274, %p275
      %p277 = scmp.le.s32.totalorder 1, %s23
      %p278 = scmp.lt.s32.totalorder %s23, 3
      %p279 = pnand %p277, %p278
      %p280 = pneg %p279
      // Predicated region
      $region9: #{tpu_custom_call.1} parent=5 // pred_check
        _
      $region10: #{tpu_custom_call.1} parent=5 // pred_check_branch
        %282 = sbr.rel (%p279) target = $region12
      $region11: #{tpu_custom_call.1} parent=5 // pred_region
        %s283 = ssub.s32 %s23, 1
        // Predicated region
        $region13: #{tpu_custom_call.1} parent=11 // pred_check
          %p284 = pneg %p70
        $region14: #{tpu_custom_call.1} parent=11 // pred_check_branch
          %286 = sbr.rel (%p284) target = $region16
        $region15: #{tpu_custom_call.1} parent=11 // pred_region
          _
        $region16: #{tpu_custom_call.1} parent=11 // pred_fallthru
          _
        // Predicated region
        $region17: #{tpu_custom_call.1} parent=11 // pred_check
          %p287 = pneg %p91
        $region18: #{tpu_custom_call.1} parent=11 // pred_check_branch
          %289 = sbr.rel (%p287) target = $region20
        $region19: #{tpu_custom_call.1} parent=11 // pred_region
          _
        $region20: #{tpu_custom_call.1} parent=11 // pred_fallthru
          _
        // Predicated region
        $region21: #{tpu_custom_call.1} parent=11 // pred_check
          %p290 = pneg %p112
        $region22: #{tpu_custom_call.1} parent=11 // pred_check_branch
          %292 = sbr.rel (%p290) target = $region24
        $region23: #{tpu_custom_call.1} parent=11 // pred_region
          _
        $region24: #{tpu_custom_call.1} parent=11 // pred_fallthru
          _
        // Predicated region
        $region25: #{tpu_custom_call.1} parent=11 // pred_check
          %p293 = pneg %p133
        $region26: #{tpu_custom_call.1} parent=11 // pred_check_branch
          %295 = sbr.rel (%p293) target = $region28
        $region27: #{tpu_custom_call.1} parent=11 // pred_region
          _
        $region28: #{tpu_custom_call.1} parent=11 // pred_fallthru
          _
        // Predicated region
        $region29: #{tpu_custom_call.1} parent=11 // pred_check
          %p296 = pneg %p154
        $region30: #{tpu_custom_call.1} parent=11 // pred_check_branch
          %298 = sbr.rel (%p296) target = $region32
        $region31: #{tpu_custom_call.1} parent=11 // pred_region
          _
        $region32: #{tpu_custom_call.1} parent=11 // pred_fallthru
          _
        // Predicated region
        $region33: #{tpu_custom_call.1} parent=11 // pred_check
          %p299 = pneg %p175
        $region34: #{tpu_custom_call.1} parent=11 // pred_check_branch
          %301 = sbr.rel (%p299) target = $region36
        $region35: #{tpu_custom_call.1} parent=11 // pred_region
          _
        $region36: #{tpu_custom_call.1} parent=11 // pred_fallthru
          _
        // Predicated region
        $region37: #{tpu_custom_call.1} parent=11 // pred_check
          %p302 = pneg %p196
        $region38: #{tpu_custom_call.1} parent=11 // pred_check_branch
          %304 = sbr.rel (%p302) target = $region40
        $region39: #{tpu_custom_call.1} parent=11 // pred_region
          _
        $region40: #{tpu_custom_call.1} parent=11 // pred_fallthru
          _
        // Predicated region
        $region41: #{tpu_custom_call.1} parent=11 // pred_check
          %p305 = pneg %p217
        $region42: #{tpu_custom_call.1} parent=11 // pred_check_branch
          %307 = sbr.rel (%p305) target = $region44
        $region43: #{tpu_custom_call.1} parent=11 // pred_region
          _
        $region44: #{tpu_custom_call.1} parent=11 // pred_fallthru
          _
      $region12: #{tpu_custom_call.1} parent=5 // pred_fallthru
        _
      %p308 = scmp.lt.s32.totalorder %s23, 2
      // Predicated region
      $region45: #{tpu_custom_call.1} parent=5 // pred_check
        %p309 = pneg %p308
      $region46: #{tpu_custom_call.1} parent=5 // pred_check_branch
        %311 = sbr.rel (%p309) target = $region48
      $region47: #{tpu_custom_call.1} parent=5 // pred_region
        // Predicated region
        $region49: #{tpu_custom_call.1} parent=47 // pred_check
          %p312 = pneg %p43
        $region50: #{tpu_custom_call.1} parent=47 // pred_check_branch
          %314 = sbr.rel (%p312) target = $region52
        $region51: #{tpu_custom_call.1} parent=47 // pred_region
          %s315 = sand.u32 %s33, 1
          %s316 = sand.u32 %s33, 1
          %s317 = smul.addr %s316, 16
          %s318 = scalar_lea.vmem [#allocation2], %s317
          %s319 = smul.addr %s23, 4
          %s320 = scalar_lea.vmem %s0, %s319
          // Predicated region
          $region53: #{tpu_custom_call.1} parent=51 // pred_check
            _
          $region54: #{tpu_custom_call.1} parent=51 // pred_check_branch
            %322 = sbr.rel (0) target = $region56
          $region55: #{tpu_custom_call.1} parent=51 // pred_region
            // Predicated region
            $region57: #{tpu_custom_call.1} parent=55 // pred_check
              _
            $region58: #{tpu_custom_call.1} parent=55 // pred_check_branch
              %324 = sbr.rel target = $region60
            $region59: #{tpu_custom_call.1} parent=55 // pred_region
              // Predicated region
              $region72: #{tpu_custom_call.1} parent=59 // pred_check
                _
              $region73: #{tpu_custom_call.1} parent=59 // pred_check_branch
                %346 = sbr.rel (0) target = $region75
              $region74: #{tpu_custom_call.1} parent=59 // pred_region
                loop: start=0, step=1, limit=1
                $region76: #{tpu_custom_call.1} parent=74 // loop_pre_header
                  _
                $region77: #{tpu_custom_call.1} parent=74 // loop_header
                  %s348 = sphi 0, %s352
                  %p349 = scmp.ge.s32.totalorder %s348, 1
                  %s353 = sphi %s320, %s320
                  %s354 = sphi %s318, %s318
                $region78: #{tpu_custom_call.1} parent=74 // loop_header_branch
                  %351 = sbr.rel (%p349) target = $region82
                $region79: #{tpu_custom_call.1} parent=74 // loop_body
                  _
                $region80: #{tpu_custom_call.1} parent=74 // loop_footer
                  %s352 = sadd.s32 1, %s348
                $region81: #{tpu_custom_call.1} parent=74 // loop_footer_branch
                  %347 = sbr.rel target = $region77
                $region82: #{tpu_custom_call.1} parent=74 // loop_exit
                  _
                %s356 = ssub.s32 16, 1
                loop: start=0, step=1, limit=1
                $region83: #{tpu_custom_call.1} parent=74 // loop_pre_header
                  _
                $region84: #{tpu_custom_call.1} parent=74 // loop_header
                  %s358 = sphi 0, %s362
                  %p359 = scmp.ge.s32.totalorder %s358, 1
                  %s363 = sphi %s320, %s320
                  %s364 = sphi %s318, %s318
                $region85: #{tpu_custom_call.1} parent=74 // loop_header_branch
                  %361 = sbr.rel (%p359) target = $region89
                $region86: #{tpu_custom_call.1} parent=74 // loop_body
                  %v365 = vld [vmem:[%s363] sm:%s356]
                  %366 = vst [vmem:[%s364] sm:%s356] %v365
                  %v367 = vld [vmem:[%s363 + $0x8] sm:%s356]
                  %368 = vst [vmem:[%s364 + $0x4] sm:%s356] %v367
                  %v369 = vld [vmem:[%s363 + $0x10] sm:%s356]
                  %370 = vst [vmem:[%s364 + $0x8] sm:%s356] %v369
                  %v371 = vld [vmem:[%s363 + $0x18] sm:%s356]
                  %372 = vst [vmem:[%s364 + $0xc] sm:%s356] %v371
                $region87: #{tpu_custom_call.1} parent=74 // loop_footer
                  %s362 = sadd.s32 1, %s358
                $region88: #{tpu_custom_call.1} parent=74 // loop_footer_branch
                  %357 = sbr.rel target = $region84
                $region89: #{tpu_custom_call.1} parent=74 // loop_exit
                  _
              $region75: #{tpu_custom_call.1} parent=59 // pred_fallthru
                _
            $region60: #{tpu_custom_call.1} parent=55 // pred_fallthru
              _
            // Predicated region
            $region61: #{tpu_custom_call.1} parent=55 // pred_check
              _
            $region62: #{tpu_custom_call.1} parent=55 // pred_check_branch
              %326 = sbr.rel (0) target = $region64
            $region63: #{tpu_custom_call.1} parent=55 // pred_region
              %s328 = ssub.s32 16, 1
              loop: start=0, step=1, limit=1
              $region65: #{tpu_custom_call.1} parent=63 // loop_pre_header
                _
              $region66: #{tpu_custom_call.1} parent=63 // loop_header
                %s330 = sphi 0, %s334
                %p331 = scmp.ge.s32.totalorder %s330, 1
                %s335 = sphi %s320, %s320
                %s336 = sphi %s318, %s318
              $region67: #{tpu_custom_call.1} parent=63 // loop_header_branch
                %333 = sbr.rel (%p331) target = $region71
              $region68: #{tpu_custom_call.1} parent=63 // loop_body
                %v337 = vld [vmem:[%s335] sm:%s328]
                %338 = vst [vmem:[%s336] sm:%s328] %v337
                %v339 = vld [vmem:[%s335 + $0x8] sm:%s328]
                %340 = vst [vmem:[%s336 + $0x4] sm:%s328] %v339
                %v341 = vld [vmem:[%s335 + $0x10] sm:%s328]
                %342 = vst [vmem:[%s336 + $0x8] sm:%s328] %v341
                %v343 = vld [vmem:[%s335 + $0x18] sm:%s328]
                %344 = vst [vmem:[%s336 + $0xc] sm:%s328] %v343
              $region69: #{tpu_custom_call.1} parent=63 // loop_footer
                %s334 = sadd.s32 1, %s330
              $region70: #{tpu_custom_call.1} parent=63 // loop_footer_branch
                %329 = sbr.rel target = $region66
              $region71: #{tpu_custom_call.1} parent=63 // loop_exit
                _
            $region64: #{tpu_custom_call.1} parent=55 // pred_fallthru
              _
          $region56: #{tpu_custom_call.1} parent=51 // pred_fallthru
            _
          %373 = vnop
        $region52: #{tpu_custom_call.1} parent=47 // pred_fallthru
          _
      $region48: #{tpu_custom_call.1} parent=5 // pred_fallthru
        _
      %p374 = scmp.le.s32.totalorder 1, %s23
      %p375 = scmp.lt.s32.totalorder %s23, 3
      %p376 = pnand %p374, %p375
      %p377 = pneg %p376
      // Predicated region
      $region90: #{tpu_custom_call.1} parent=5 // pred_check
        _
      $region91: #{tpu_custom_call.1} parent=5 // pred_check_branch
        %379 = sbr.rel (%p376) target = $region93
      $region92: #{tpu_custom_call.1} parent=5 // pred_region
        %s380 = ssub.s32 %s23, 1
        %s381 = sand.u32 %s36, 1
        %s382 = sand.u32 %s36, 1
        %s383 = smul.addr %s382, 16
        %s384 = scalar_lea.vmem [#allocation2], %s383
        // Predicated region
        $region94: #{tpu_custom_call.1} parent=92 // pred_check
          %p385 = pneg %p49
        $region95: #{tpu_custom_call.1} parent=92 // pred_check_branch
          %387 = sbr.rel (%p385) target = $region97
        $region96: #{tpu_custom_call.1} parent=92 // pred_region
          _
        $region97: #{tpu_custom_call.1} parent=92 // pred_fallthru
          _
        %s388 = sand.u32 %s36, 1
        %s389 = sand.u32 %s36, 1
        %s390 = smul.addr %s389, 16
        %s391 = scalar_lea.vmem [#allocation2], %s390
        %p392 = pneg %p49
        %p393 = pneg %p46
        %p394 = pneg %p70
        %p395 = pneg %p67
        %p396 = pneg %p91
        %p397 = pneg %p88
        %p398 = pneg %p112
        %p399 = pneg %p109
        %p400 = pneg %p133
        %p401 = pneg %p130
        %p402 = pneg %p154
        %p403 = pneg %p151
        %p404 = pneg %p175
        %p405 = pneg %p172
        %p406 = pneg %p196
        %p407 = pneg %p193
        %p408 = pneg %p217
        %p409 = pneg %p214
        %p410 = pneg %p243
        %p411 = pneg %p240
        %s412 = sand.u32 %s230, 1
        %s413 = scalar_lea.sflag [#allocation4], %s412
        %s414 = sand.u32 %s230, 1
        %s415 = smul.addr %s414, 16
        %s416 = scalar_lea.vmem [#allocation3], %s415
        %p417 = pneg %p269
        %p418 = pneg %p266
        %s419 = sand.u32 %s256, 1
        %s420 = scalar_lea.sflag [#allocation6], %s419
        %s421 = sand.u32 %s256, 1
        %s422 = smul.addr %s421, 32
        %s423 = scalar_lea.vmem [#allocation5], %s422
        %v425 = vld [vmem:[%s384] sm:$0xf]
        %v426 = vld [vmem:[%s384 + $0x4] sm:$0xf]
        %v427 = vld [vmem:[%s384 + $0x8] sm:$0xf]
        %v428 = vld [vmem:[%s384 + $0xc] sm:$0xf]
        %v429 = vld [vmem:[%s1] sm:$0xf]
        %v430 = vld [vmem:[%s1 + $0x4] sm:$0xf]
        %v431 = vld [vmem:[%s1 + $0x8] sm:$0xf]
        %v432 = vld [vmem:[%s1 + $0xc] sm:$0xf]
        %v433 = vld [vmem:[%s1 + $0x10] sm:$0xf]
        %v434 = vld [vmem:[%s1 + $0x14] sm:$0xf]
        %v435 = vld [vmem:[%s1 + $0x18] sm:$0xf]
        %v436 = vld [vmem:[%s1 + $0x1c] sm:$0xf]
        %v437 = vld [vmem:[%s3] sm:$0xff]
        %v438 = vld [vmem:[%s3 + $0x8] sm:$0xff]
        %v439 = vld [vmem:[%s3 + $0x10] sm:$0xff]
        %v440 = vld [vmem:[%s3 + $0x18] sm:$0xff]
        %v441 = vld [vmem:[%s3 + $0x20] sm:$0xff]
        %v442 = vld [vmem:[%s3 + $0x28] sm:$0xff]
        %v443 = vld [vmem:[%s3 + $0x30] sm:$0xff]
        %v444 = vld [vmem:[%s3 + $0x38] sm:$0xff]
        %446 = vset.pattern.permute.xlu0 0
        %447 = vperm.xlu0 %446, %v437
        %v448 = vpop.permute.xlu0 %447
        %451 = vset.pattern.permute.xlu0 0
        %452 = vperm.xlu0 %451, %v438
        %v453 = vpop.permute.xlu0 %452
        %456 = vset.pattern.permute.xlu0 0
        %457 = vperm.xlu0 %456, %v439
        %v458 = vpop.permute.xlu0 %457
        %461 = vset.pattern.permute.xlu0 0
        %462 = vperm.xlu0 %461, %v440
        %v463 = vpop.permute.xlu0 %462
        %466 = vset.pattern.permute.xlu0 0
        %467 = vperm.xlu0 %466, %v441
        %v468 = vpop.permute.xlu0 %467
        %471 = vset.pattern.permute.xlu0 0
        %472 = vperm.xlu0 %471, %v442
        %v473 = vpop.permute.xlu0 %472
        %476 = vset.pattern.permute.xlu0 0
        %477 = vperm.xlu0 %476, %v443
        %v478 = vpop.permute.xlu0 %477
        %481 = vset.pattern.permute.xlu0 0
        %482 = vperm.xlu0 %481, %v444
        %v483 = vpop.permute.xlu0 %482
        %v493 = vunpack.c.l.b16 %v429
        %v494 = vunpack.c.l.b16 %v430
        %v495 = vunpack.c.l.b16 %v431
        %v496 = vunpack.c.l.b16 %v432
        %v497 = vunpack.c.l.b16 %v433
        %v498 = vunpack.c.l.b16 %v434
        %v499 = vunpack.c.l.b16 %v435
        %v500 = vunpack.c.l.b16 %v436
        %v501 = vpack.c.b16 %v494, %v493
        %v502 = vpack.c.b16 %v496, %v495
        %v503 = vpack.c.b16 %v498, %v497
        %v504 = vpack.c.b16 %v500, %v499
        %v509 = vunpack.c.l.b16 %v425
        %v510 = vunpack.c.l.b16 %v426
        %v511 = vunpack.c.l.b16 %v427
        %v512 = vunpack.c.l.b16 %v428
        %v513 = vpack.c.b16 %v510, %v509
        %v514 = vpack.c.b16 %v512, %v511
        %vm517 = vcmask 261120
        %v519 = vsel %vm517, %v501, 0
        %v522 = vsel %vm517, %v502, 0
        %v525 = vsel %vm517, %v503, 0
        %v528 = vsel %vm517, %v504, 0
        %530 = vmatprep.subr.bf16.mxu0 0
        %531 = vmatpush1.bf16.msra.mxu0 0
        %532 = vmatprep.subr.bf16.mxu0 0
        %533 = vmatpush1.bf16.msra.mxu0 0
        %534 = vmatprep.subr.bf16.mxu0 0
        %535 = vmatpush1.bf16.msra.mxu0 0
        %536 = vmatprep.subr.bf16.mxu0 0
        %537 = vmatpush1.bf16.msra.mxu0 0
        %538 = vmatprep.subr.bf16.mxu0 0
        %539 = vmatpush1.bf16.msra.mxu0 0
        %540 = vmatprep.subr.bf16.mxu0 0
        %541 = vmatpush1.bf16.msra.mxu0 0
        %542 = vmatprep.subr.bf16.mxu0 0
        %543 = vmatpush1.bf16.msra.mxu0 %v514
        %544 = vmatprep.subr.bf16.mxu0 0
        %545 = vmatpush1.bf16.msra.mxu0 %v513
        %546 = vmatprep.subr.bf16.mxu0 0
        %547 = vmatpush2.bf16.msra.mxu0 0
        %548 = vmatprep.subr.bf16.mxu0 0
        %549 = vmatpush2.bf16.msra.mxu0 0
        %550 = vmatprep.subr.bf16.mxu0 0
        %551 = vmatpush2.bf16.msra.mxu0 0
        %552 = vmatprep.subr.bf16.mxu0 0
        %553 = vmatpush2.bf16.msra.mxu0 0
        %554 = vmatprep.subr.bf16.mxu0 0
        %555 = vmatpush2.bf16.msra.mxu0 0
        %556 = vmatprep.subr.bf16.mxu0 0
        %557 = vmatpush2.bf16.msra.mxu0 0
        %558 = vmatprep.subr.bf16.mxu0 0
        %559 = vmatpush2.bf16.msra.mxu0 0
        %560 = vmatprep.subr.bf16.mxu0 0
        %561 = vmatpush2.bf16.msra.mxu0 0
        %562 = vmatprep.mubr.bf16.mxu0 0
        %563 = vmatmul.mubr.bf16.gmra.mxu0 %v519
        %v564 = vpop.f32.mrf.mxu0
        %v565 = vadd.f32 %v448, %v564
        %v566 = vpop.f32.mrf.mxu0
        %v567 = vpop.f32.mrf.mxu0
        %v568 = vadd.f32 %v453, %v567
        %v569 = vpop.f32.mrf.mxu0
        %570 = vmatprep.mubr.bf16.mxu0 0
        %571 = vmatmul.mubr.bf16.gmra.mxu0 %v522
        %v572 = vpop.f32.mrf.mxu0
        %v573 = vadd.f32 %v458, %v572
        %v574 = vpop.f32.mrf.mxu0
        %v575 = vpop.f32.mrf.mxu0
        %v576 = vadd.f32 %v463, %v575
        %v577 = vpop.f32.mrf.mxu0
        %578 = vmatprep.mubr.bf16.mxu0 0
        %579 = vmatmul.mubr.bf16.gmra.mxu0 %v525
        %v580 = vpop.f32.mrf.mxu0
        %v581 = vadd.f32 %v468, %v580
        %v582 = vpop.f32.mrf.mxu0
        %v583 = vpop.f32.mrf.mxu0
        %v584 = vadd.f32 %v473, %v583
        %v585 = vpop.f32.mrf.mxu0
        %586 = vmatprep.mubr.bf16.mxu0 0
        %587 = vmatmul.mubr.bf16.gmra.mxu0 %v528
        %v588 = vpop.f32.mrf.mxu0
        %v589 = vadd.f32 %v478, %v588
        %v590 = vpop.f32.mrf.mxu0
        %v591 = vpop.f32.mrf.mxu0
        %v592 = vadd.f32 %v483, %v591
        %v593 = vpop.f32.mrf.mxu0
        %594 = vdwg.mxu0
        %v595 = vxor.u32 %v565, 2147483648
        %v596 = vxor.u32 %v568, 2147483648
        %v597 = vxor.u32 %v573, 2147483648
        %v598 = vxor.u32 %v576, 2147483648
        %v599 = vxor.u32 %v581, 2147483648
        %v600 = vxor.u32 %v584, 2147483648
        %v601 = vxor.u32 %v589, 2147483648
        %v602 = vxor.u32 %v592, 2147483648
        %v603 = vmul.f32 %v595, 1.442695
        %v604 = vpow.pop %v603
        %v605 = vmul.f32 %v596, 1.442695
        %v606 = vpow.pop %v605
        %v607 = vmul.f32 %v597, 1.442695
        %v608 = vpow.pop %v607
        %v609 = vmul.f32 %v598, 1.442695
        %v610 = vpow.pop %v609
        %v611 = vmul.f32 %v599, 1.442695
        %v612 = vpow.pop %v611
        %v613 = vmul.f32 %v600, 1.442695
        %v614 = vpow.pop %v613
        %v615 = vmul.f32 %v601, 1.442695
        %v616 = vpow.pop %v615
        %v617 = vmul.f32 %v602, 1.442695
        %v618 = vpow.pop %v617
        %v619 = vadd.f32 %v604, 1.0
        %v620 = vadd.f32 %v606, 1.0
        %v621 = vadd.f32 %v608, 1.0
        %v622 = vadd.f32 %v610, 1.0
        %v623 = vadd.f32 %v612, 1.0
        %v624 = vadd.f32 %v614, 1.0
        %v625 = vadd.f32 %v616, 1.0
        %v626 = vadd.f32 %v618, 1.0
        %v627 = vrcp.pop %v619
        %v628 = vmul.f32 1.0, %v627
        %v629 = vrcp.pop %v620
        %v630 = vmul.f32 1.0, %v629
        %v631 = vrcp.pop %v621
        %v632 = vmul.f32 1.0, %v631
        %v633 = vrcp.pop %v622
        %v634 = vmul.f32 1.0, %v633
        %v635 = vrcp.pop %v623
        %v636 = vmul.f32 1.0, %v635
        %v637 = vrcp.pop %v624
        %v638 = vmul.f32 1.0, %v637
        %v639 = vrcp.pop %v625
        %v640 = vmul.f32 1.0, %v639
        %v641 = vrcp.pop %v626
        %v642 = vmul.f32 1.0, %v641
        %v643 = vmul.f32 %v565, %v628
        %v644 = vmul.f32 %v568, %v630
        %v645 = vmul.f32 %v573, %v632
        %v646 = vmul.f32 %v576, %v634
        %v647 = vmul.f32 %v581, %v636
        %v648 = vmul.f32 %v584, %v638
        %v649 = vmul.f32 %v589, %v640
        %v650 = vmul.f32 %v592, %v642
        %v651 = vpack.c.bf16 %v644, %v643
        %v652 = vpack.c.bf16 %v646, %v645
        %v653 = vpack.c.bf16 %v648, %v647
        %v654 = vpack.c.bf16 %v650, %v649
        %v655 = vld [vmem:[%s2] sm:$0xf]
        %v656 = vld [vmem:[%s2 + $0x4] sm:$0xf]
        %v657 = vld [vmem:[%s4] sm:$0xff]
        %v658 = vld [vmem:[%s4 + $0x8] sm:$0xff]
        %660 = vset.pattern.permute.xlu0 0
        %661 = vperm.xlu0 %660, %v657
        %v662 = vpop.permute.xlu0 %661
        %665 = vset.pattern.permute.xlu0 0
        %666 = vperm.xlu0 %665, %v658
        %v667 = vpop.permute.xlu0 %666
        %v671 = vunpack.c.l.b16 %v655
        %v672 = vunpack.c.l.b16 %v656
        %v673 = vpack.c.b16 %v672, %v671
        %vm674 = vcmask 523264
        %v676 = vsel %vm674, %v673, 0
        %678 = vmatprep.subr.bf16.mxu0 0
        %679 = vmatpush1.bf16.msra.mxu0 0
        %680 = vmatprep.subr.bf16.mxu0 0
        %681 = vmatpush1.bf16.msra.mxu0 0
        %682 = vmatprep.subr.bf16.mxu0 0
        %683 = vmatpush1.bf16.msra.mxu0 0
        %684 = vmatprep.subr.bf16.mxu0 0
        %685 = vmatpush1.bf16.msra.mxu0 0
        %686 = vmatprep.subr.bf16.mxu0 0
        %687 = vmatpush1.bf16.msra.mxu0 %v654
        %688 = vmatprep.subr.bf16.mxu0 0
        %689 = vmatpush1.bf16.msra.mxu0 %v653
        %690 = vmatprep.subr.bf16.mxu0 0
        %691 = vmatpush1.bf16.msra.mxu0 %v652
        %692 = vmatprep.subr.bf16.mxu0 0
        %693 = vmatpush1.bf16.msra.mxu0 %v651
        %694 = vmatprep.subr.bf16.mxu0 0
        %695 = vmatpush2.bf16.msra.mxu0 0
        %696 = vmatprep.subr.bf16.mxu0 0
        %697 = vmatpush2.bf16.msra.mxu0 0
        %698 = vmatprep.subr.bf16.mxu0 0
        %699 = vmatpush2.bf16.msra.mxu0 0
        %700 = vmatprep.subr.bf16.mxu0 0
        %701 = vmatpush2.bf16.msra.mxu0 0
        %702 = vmatprep.subr.bf16.mxu0 0
        %703 = vmatpush2.bf16.msra.mxu0 0
        %704 = vmatprep.subr.bf16.mxu0 0
        %705 = vmatpush2.bf16.msra.mxu0 0
        %706 = vmatprep.subr.bf16.mxu0 0
        %707 = vmatpush2.bf16.msra.mxu0 0
        %708 = vmatprep.subr.bf16.mxu0 0
        %709 = vmatpush2.bf16.msra.mxu0 0
        %710 = vmatprep.mubr.bf16.mxu0 0
        %711 = vmatmul.mubr.bf16.gmra.mxu0 %v676
        %v712 = vpop.f32.mrf.mxu0
        %v713 = vadd.f32 %v662, %v712
        %v714 = vpop.f32.mrf.mxu0
        %v715 = vpop.f32.mrf.mxu0
        %v716 = vadd.f32 %v667, %v715
        %v717 = vpop.f32.mrf.mxu0
        %718 = vdwg.mxu0
        %719 = vst [vmem:[%s416] sm:$0xff] %v713
        %720 = vst [vmem:[%s416 + $0x8] sm:$0xff] %v716
        %v721 = vxor.u32 %v713, 2147483648
        %v722 = vxor.u32 %v716, 2147483648
        %v723 = vmul.f32 %v721, 1.442695
        %v724 = vpow.pop %v723
        %v725 = vmul.f32 %v722, 1.442695
        %v726 = vpow.pop %v725
        %v727 = vadd.f32 %v724, 1.0
        %v728 = vadd.f32 %v726, 1.0
        %v729 = vrcp.pop %v727
        %v730 = vmul.f32 1.0, %v729
        %v731 = vrcp.pop %v728
        %v732 = vmul.f32 1.0, %v731
        %v733 = vmul.f32 %v713, %v730
        %v734 = vmul.f32 %v716, %v732
        %v735 = vpack.c.bf16 %v734, %v733
        %v736 = vld [vmem:[%s5] sm:$0xf]
        %v737 = vld [vmem:[%s5 + $0x4] sm:$0xf]
        %v738 = vld [vmem:[%s5 + $0x8] sm:$0xf]
        %v739 = vld [vmem:[%s5 + $0xc] sm:$0xf]
        %v740 = vld [vmem:[%s5 + $0x10] sm:$0xf]
        %v741 = vld [vmem:[%s5 + $0x14] sm:$0xf]
        %v742 = vld [vmem:[%s5 + $0x18] sm:$0xf]
        %v743 = vld [vmem:[%s5 + $0x1c] sm:$0xf]
        %v744 = vld [vmem:[%s7] sm:$0xff]
        %v745 = vld [vmem:[%s7 + $0x8] sm:$0xff]
        %v746 = vld [vmem:[%s7 + $0x10] sm:$0xff]
        %v747 = vld [vmem:[%s7 + $0x18] sm:$0xff]
        %v748 = vld [vmem:[%s7 + $0x20] sm:$0xff]
        %v749 = vld [vmem:[%s7 + $0x28] sm:$0xff]
        %v750 = vld [vmem:[%s7 + $0x30] sm:$0xff]
        %v751 = vld [vmem:[%s7 + $0x38] sm:$0xff]
        %753 = vset.pattern.permute.xlu0 0
        %754 = vperm.xlu0 %753, %v744
        %v755 = vpop.permute.xlu0 %754
        %758 = vset.pattern.permute.xlu0 0
        %759 = vperm.xlu0 %758, %v745
        %v760 = vpop.permute.xlu0 %759
        %763 = vset.pattern.permute.xlu0 0
        %764 = vperm.xlu0 %763, %v746
        %v765 = vpop.permute.xlu0 %764
        %768 = vset.pattern.permute.xlu0 0
        %769 = vperm.xlu0 %768, %v747
        %v770 = vpop.permute.xlu0 %769
        %773 = vset.pattern.permute.xlu0 0
        %774 = vperm.xlu0 %773, %v748
        %v775 = vpop.permute.xlu0 %774
        %778 = vset.pattern.permute.xlu0 0
        %779 = vperm.xlu0 %778, %v749
        %v780 = vpop.permute.xlu0 %779
        %783 = vset.pattern.permute.xlu0 0
        %784 = vperm.xlu0 %783, %v750
        %v785 = vpop.permute.xlu0 %784
        %788 = vset.pattern.permute.xlu0 0
        %789 = vperm.xlu0 %788, %v751
        %v790 = vpop.permute.xlu0 %789
        %v800 = vunpack.c.l.b16 %v736
        %v801 = vunpack.c.l.b16 %v737
        %v802 = vunpack.c.l.b16 %v738
        %v803 = vunpack.c.l.b16 %v739
        %v804 = vunpack.c.l.b16 %v740
        %v805 = vunpack.c.l.b16 %v741
        %v806 = vunpack.c.l.b16 %v742
        %v807 = vunpack.c.l.b16 %v743
        %v808 = vpack.c.b16 %v801, %v800
        %v809 = vpack.c.b16 %v803, %v802
        %v810 = vpack.c.b16 %v805, %v804
        %v811 = vpack.c.b16 %v807, %v806
        %vm812 = vcmask 130048
        %v814 = vsel %vm812, %v808, 0
        %v817 = vsel %vm812, %v809, 0
        %v820 = vsel %vm812, %v810, 0
        %v823 = vsel %vm812, %v811, 0
        %825 = vmatprep.subr.bf16.mxu0 0
        %826 = vmatpush1.bf16.msra.mxu0 0
        %827 = vmatprep.subr.bf16.mxu0 0
        %828 = vmatpush1.bf16.msra.mxu0 0
        %829 = vmatprep.subr.bf16.mxu0 0
        %830 = vmatpush1.bf16.msra.mxu0 0
        %831 = vmatprep.subr.bf16.mxu0 0
        %832 = vmatpush1.bf16.msra.mxu0 0
        %833 = vmatprep.subr.bf16.mxu0 0
        %834 = vmatpush1.bf16.msra.mxu0 0
        %835 = vmatprep.subr.bf16.mxu0 0
        %836 = vmatpush1.bf16.msra.mxu0 0
        %837 = vmatprep.subr.bf16.mxu0 0
        %838 = vmatpush1.bf16.msra.mxu0 0
        %839 = vmatprep.subr.bf16.mxu0 0
        %840 = vmatpush1.bf16.msra.mxu0 %v735
        %841 = vmatprep.subr.bf16.mxu0 0
        %842 = vmatpush2.bf16.msra.mxu0 0
        %843 = vmatprep.subr.bf16.mxu0 0
        %844 = vmatpush2.bf16.msra.mxu0 0
        %845 = vmatprep.subr.bf16.mxu0 0
        %846 = vmatpush2.bf16.msra.mxu0 0
        %847 = vmatprep.subr.bf16.mxu0 0
        %848 = vmatpush2.bf16.msra.mxu0 0
        %849 = vmatprep.subr.bf16.mxu0 0
        %850 = vmatpush2.bf16.msra.mxu0 0
        %851 = vmatprep.subr.bf16.mxu0 0
        %852 = vmatpush2.bf16.msra.mxu0 0
        %853 = vmatprep.subr.bf16.mxu0 0
        %854 = vmatpush2.bf16.msra.mxu0 0
        %855 = vmatprep.subr.bf16.mxu0 0
        %856 = vmatpush2.bf16.msra.mxu0 0
        %857 = vmatprep.mubr.bf16.mxu0 0
        %858 = vmatmul.mubr.bf16.gmra.mxu0 %v814
        %v859 = vpop.f32.mrf.mxu0
        %v860 = vadd.f32 %v755, %v859
        %v861 = vpop.f32.mrf.mxu0
        %v862 = vpop.f32.mrf.mxu0
        %v863 = vadd.f32 %v760, %v862
        %v864 = vpop.f32.mrf.mxu0
        %865 = vmatprep.mubr.bf16.mxu0 0
        %866 = vmatmul.mubr.bf16.gmra.mxu0 %v817
        %v867 = vpop.f32.mrf.mxu0
        %v868 = vadd.f32 %v765, %v867
        %v869 = vpop.f32.mrf.mxu0
        %v870 = vpop.f32.mrf.mxu0
        %v871 = vadd.f32 %v770, %v870
        %v872 = vpop.f32.mrf.mxu0
        %873 = vmatprep.mubr.bf16.mxu0 0
        %874 = vmatmul.mubr.bf16.gmra.mxu0 %v820
        %v875 = vpop.f32.mrf.mxu0
        %v876 = vadd.f32 %v775, %v875
        %v877 = vpop.f32.mrf.mxu0
        %v878 = vpop.f32.mrf.mxu0
        %v879 = vadd.f32 %v780, %v878
        %v880 = vpop.f32.mrf.mxu0
        %881 = vmatprep.mubr.bf16.mxu0 0
        %882 = vmatmul.mubr.bf16.gmra.mxu0 %v823
        %v883 = vpop.f32.mrf.mxu0
        %v884 = vadd.f32 %v785, %v883
        %v885 = vpop.f32.mrf.mxu0
        %v886 = vpop.f32.mrf.mxu0
        %v887 = vadd.f32 %v790, %v886
        %v888 = vpop.f32.mrf.mxu0
        %889 = vdwg.mxu0
        %v890 = vxor.u32 %v860, 2147483648
        %v891 = vxor.u32 %v863, 2147483648
        %v892 = vxor.u32 %v868, 2147483648
        %v893 = vxor.u32 %v871, 2147483648
        %v894 = vxor.u32 %v876, 2147483648
        %v895 = vxor.u32 %v879, 2147483648
        %v896 = vxor.u32 %v884, 2147483648
        %v897 = vxor.u32 %v887, 2147483648
        %v898 = vmul.f32 %v890, 1.442695
        %v899 = vpow.pop %v898
        %v900 = vmul.f32 %v891, 1.442695
        %v901 = vpow.pop %v900
        %v902 = vmul.f32 %v892, 1.442695
        %v903 = vpow.pop %v902
        %v904 = vmul.f32 %v893, 1.442695
        %v905 = vpow.pop %v904
        %v906 = vmul.f32 %v894, 1.442695
        %v907 = vpow.pop %v906
        %v908 = vmul.f32 %v895, 1.442695
        %v909 = vpow.pop %v908
        %v910 = vmul.f32 %v896, 1.442695
        %v911 = vpow.pop %v910
        %v912 = vmul.f32 %v897, 1.442695
        %v913 = vpow.pop %v912
        %v914 = vadd.f32 %v899, 1.0
        %v915 = vadd.f32 %v901, 1.0
        %v916 = vadd.f32 %v903, 1.0
        %v917 = vadd.f32 %v905, 1.0
        %v918 = vadd.f32 %v907, 1.0
        %v919 = vadd.f32 %v909, 1.0
        %v920 = vadd.f32 %v911, 1.0
        %v921 = vadd.f32 %v913, 1.0
        %v922 = vrcp.pop %v914
        %v923 = vmul.f32 1.0, %v922
        %v924 = vrcp.pop %v915
        %v925 = vmul.f32 1.0, %v924
        %v926 = vrcp.pop %v916
        %v927 = vmul.f32 1.0, %v926
        %v928 = vrcp.pop %v917
        %v929 = vmul.f32 1.0, %v928
        %v930 = vrcp.pop %v918
        %v931 = vmul.f32 1.0, %v930
        %v932 = vrcp.pop %v919
        %v933 = vmul.f32 1.0, %v932
        %v934 = vrcp.pop %v920
        %v935 = vmul.f32 1.0, %v934
        %v936 = vrcp.pop %v921
        %v937 = vmul.f32 1.0, %v936
        %v938 = vmul.f32 %v860, %v923
        %v939 = vmul.f32 %v863, %v925
        %v940 = vmul.f32 %v868, %v927
        %v941 = vmul.f32 %v871, %v929
        %v942 = vmul.f32 %v876, %v931
        %v943 = vmul.f32 %v879, %v933
        %v944 = vmul.f32 %v884, %v935
        %v945 = vmul.f32 %v887, %v937
        %v946 = vpack.c.bf16 %v939, %v938
        %v947 = vpack.c.bf16 %v941, %v940
        %v948 = vpack.c.bf16 %v943, %v942
        %v949 = vpack.c.bf16 %v945, %v944
        %v950 = vld [vmem:[%s6] sm:$0xf]
        %v951 = vld [vmem:[%s6 + $0x4] sm:$0xf]
        %v952 = vld [vmem:[%s6 + $0x8] sm:$0xf]
        %v953 = vld [vmem:[%s6 + $0xc] sm:$0xf]
        %v954 = vld [vmem:[%s8] sm:$0xff]
        %v955 = vld [vmem:[%s8 + $0x8] sm:$0xff]
        %v956 = vld [vmem:[%s8 + $0x10] sm:$0xff]
        %v957 = vld [vmem:[%s8 + $0x18] sm:$0xff]
        %959 = vset.pattern.permute.xlu0 0
        %960 = vperm.xlu0 %959, %v954
        %v961 = vpop.permute.xlu0 %960
        %964 = vset.pattern.permute.xlu0 0
        %965 = vperm.xlu0 %964, %v955
        %v966 = vpop.permute.xlu0 %965
        %969 = vset.pattern.permute.xlu0 0
        %970 = vperm.xlu0 %969, %v956
        %v971 = vpop.permute.xlu0 %970
        %974 = vset.pattern.permute.xlu0 0
        %975 = vperm.xlu0 %974, %v957
        %v976 = vpop.permute.xlu0 %975
        %v982 = vunpack.c.l.b16 %v950
        %v983 = vunpack.c.l.b16 %v951
        %v984 = vunpack.c.l.b16 %v952
        %v985 = vunpack.c.l.b16 %v953
        %v986 = vpack.c.b16 %v983, %v982
        %v987 = vpack.c.b16 %v985, %v984
        %v989 = vsel %vm674, %v986, 0
        %v992 = vsel %vm674, %v987, 0
        %994 = vmatprep.subr.bf16.mxu0 0
        %995 = vmatpush1.bf16.msra.mxu0 0
        %996 = vmatprep.subr.bf16.mxu0 0
        %997 = vmatpush1.bf16.msra.mxu0 0
        %998 = vmatprep.subr.bf16.mxu0 0
        %999 = vmatpush1.bf16.msra.mxu0 0
        %1000 = vmatprep.subr.bf16.mxu0 0
        %1001 = vmatpush1.bf16.msra.mxu0 0
        %1002 = vmatprep.subr.bf16.mxu0 0
        %1003 = vmatpush1.bf16.msra.mxu0 %v949
        %1004 = vmatprep.subr.bf16.mxu0 0
        %1005 = vmatpush1.bf16.msra.mxu0 %v948
        %1006 = vmatprep.subr.bf16.mxu0 0
        %1007 = vmatpush1.bf16.msra.mxu0 %v947
        %1008 = vmatprep.subr.bf16.mxu0 0
        %1009 = vmatpush1.bf16.msra.mxu0 %v946
        %1010 = vmatprep.subr.bf16.mxu0 0
        %1011 = vmatpush2.bf16.msra.mxu0 0
        %1012 = vmatprep.subr.bf16.mxu0 0
        %1013 = vmatpush2.bf16.msra.mxu0 0
        %1014 = vmatprep.subr.bf16.mxu0 0
        %1015 = vmatpush2.bf16.msra.mxu0 0
        %1016 = vmatprep.subr.bf16.mxu0 0
        %1017 = vmatpush2.bf16.msra.mxu0 0
        %1018 = vmatprep.subr.bf16.mxu0 0
        %1019 = vmatpush2.bf16.msra.mxu0 0
        %1020 = vmatprep.subr.bf16.mxu0 0
        %1021 = vmatpush2.bf16.msra.mxu0 0
        %1022 = vmatprep.subr.bf16.mxu0 0
        %1023 = vmatpush2.bf16.msra.mxu0 0
        %1024 = vmatprep.subr.bf16.mxu0 0
        %1025 = vmatpush2.bf16.msra.mxu0 0
        %1026 = vmatprep.mubr.bf16.mxu0 0
        %1027 = vmatmul.mubr.bf16.gmra.mxu0 %v989
        %v1028 = vpop.f32.mrf.mxu0
        %v1029 = vadd.f32 %v961, %v1028
        %v1030 = vpop.f32.mrf.mxu0
        %v1031 = vpop.f32.mrf.mxu0
        %v1032 = vadd.f32 %v966, %v1031
        %v1033 = vpop.f32.mrf.mxu0
        %1034 = vmatprep.mubr.bf16.mxu0 0
        %1035 = vmatmul.mubr.bf16.gmra.mxu0 %v992
        %v1036 = vpop.f32.mrf.mxu0
        %v1037 = vadd.f32 %v971, %v1036
        %v1038 = vpop.f32.mrf.mxu0
        %v1039 = vpop.f32.mrf.mxu0
        %v1040 = vadd.f32 %v976, %v1039
        %v1041 = vpop.f32.mrf.mxu0
        %1042 = vdwg.mxu0
        %1043 = vst [vmem:[%s423] sm:$0xff] %v1029
        %1044 = vst [vmem:[%s423 + $0x8] sm:$0xff] %v1032
        %1045 = vst [vmem:[%s423 + $0x10] sm:$0xff] %v1037
        %1046 = vst [vmem:[%s423 + $0x18] sm:$0xff] %v1040
        %s1047 = sand.u32 %s230, 1
        %s1048 = scalar_lea.sflag [#allocation4], %s1047
        %s1049 = sand.u32 %s230, 1
        %s1050 = smul.addr %s1049, 16
        %s1051 = scalar_lea.vmem [#allocation3], %s1050
        %s1052 = sand.u32 %s256, 1
        %s1053 = scalar_lea.sflag [#allocation6], %s1052
        %s1054 = sand.u32 %s256, 1
        %s1055 = smul.addr %s1054, 32
        %s1056 = scalar_lea.vmem [#allocation5], %s1055
        // Predicated region
        $region98: #{tpu_custom_call.1} parent=92 // pred_check
          %p1057 = pneg %p240
        $region99: #{tpu_custom_call.1} parent=92 // pred_check_branch
          %1059 = sbr.rel (%p1057) target = $region101
        $region100: #{tpu_custom_call.1} parent=92 // pred_region
          %s1061 = ssub.s32 256, 256
          %1062 = vsyncadd %s1048, %s1061
          %s1063 = smul.addr %s28, 128
          %s1064 = scalar_lea.hbm %s9, %s1063
          %s1065 = sshll.u32 %s1051, 4
          %s1066 = int_to_ptr.vmem [resolvable:$true] %s1065
          %1071 = dma.vmem_to_hbm [thread:$0]  %s1066, 256, %s1064, %s1048, 128, 256, 8
        $region101: #{tpu_custom_call.1} parent=92 // pred_fallthru
          _
        // Predicated region
        $region102: #{tpu_custom_call.1} parent=92 // pred_check
          %p1072 = pneg %p266
        $region103: #{tpu_custom_call.1} parent=92 // pred_check_branch
          %1074 = sbr.rel (%p1072) target = $region105
        $region104: #{tpu_custom_call.1} parent=92 // pred_region
          %s1076 = ssub.s32 512, 512
          %1077 = vsyncadd %s1053, %s1076
          %s1078 = smul.addr %s28, 128
          %s1079 = scalar_lea.hbm %s10, %s1078
          %s1080 = sshll.u32 %s1056, 4
          %s1081 = int_to_ptr.vmem [resolvable:$true] %s1080
          %1086 = dma.vmem_to_hbm [thread:$0]  %s1081, 512, %s1079, %s1053, 128, 256, 8
        $region105: #{tpu_custom_call.1} parent=92 // pred_fallthru
          _
      $region93: #{tpu_custom_call.1} parent=5 // pred_fallthru
        _
      %p1087 = scmp.le.s32.totalorder 2, %s23
      // Predicated region
      $region106: #{tpu_custom_call.1} parent=5 // pred_check
        %p1088 = pneg %p1087
      $region107: #{tpu_custom_call.1} parent=5 // pred_check_branch
        %1090 = sbr.rel (%p1088) target = $region109
      $region108: #{tpu_custom_call.1} parent=5 // pred_region
        %s1091 = ssub.s32 %s23, 2
        // Predicated region
        $region110: #{tpu_custom_call.1} parent=108 // pred_check
          %p1092 = pneg %p246
        $region111: #{tpu_custom_call.1} parent=108 // pred_check_branch
          %1094 = sbr.rel (%p1092) target = $region113
        $region112: #{tpu_custom_call.1} parent=108 // pred_region
          %s1095 = sand.u32 %s231, 1
          %s1096 = scalar_lea.sflag [#allocation4], %s1095
          %s1097 = sand.u32 %s231, 1
          %s1098 = smul.addr %s1097, 16
          %s1099 = scalar_lea.vmem [#allocation3], %s1098
          %1100 = dma.done %s1096, 256
        $region113: #{tpu_custom_call.1} parent=108 // pred_fallthru
          _
        // Predicated region
        $region114: #{tpu_custom_call.1} parent=108 // pred_check
          %p1101 = pneg %p272
        $region115: #{tpu_custom_call.1} parent=108 // pred_check_branch
          %1103 = sbr.rel (%p1101) target = $region117
        $region116: #{tpu_custom_call.1} parent=108 // pred_region
          %s1104 = sand.u32 %s257, 1
          %s1105 = scalar_lea.sflag [#allocation6], %s1104
          %s1106 = sand.u32 %s257, 1
          %s1107 = smul.addr %s1106, 32
          %s1108 = scalar_lea.vmem [#allocation5], %s1107
          %1109 = dma.done %s1105, 512
        $region117: #{tpu_custom_call.1} parent=108 // pred_fallthru
          _
      $region109: #{tpu_custom_call.1} parent=5 // pred_fallthru
        _
    $region6: #{tpu_custom_call.1} parent=1 // loop_footer
      %s27 = sadd.s32 1, %s23
    $region7: #{tpu_custom_call.1} parent=1 // loop_footer_branch
      %22 = sbr.rel target = $region3
    $region8: #{tpu_custom_call.1} parent=1 // loop_exit
      _
    %1110 = vsyncpa [#allocation4], 1
    %s1111 = scalar_lea.sflag [#allocation4], 1
    %1112 = vsyncpa %s1111, 1
    %1113 = vsyncpa [#allocation6], 1
    %s1114 = scalar_lea.sflag [#allocation6], 1
    %1115 = vsyncpa %s1114, 1

</llo_original>
